<compile_context>
chip_gen: v7x
topology: tpu7x:2x2x1
jax: 0.10.0
libtpu: 0.0.40
codegen_flags: <defaults>
</compile_context>

<pallas_src>
import functools

import jax
import jax.numpy as jnp
from jax import lax
from jax.experimental import pallas as pl
from jax.experimental.pallas import tpu as pltpu


_VMEM_BUDGET_BYTES = 16 * 1024 * 1024   # ~4 pipelined buffers of up to ~4 MiB


def _cdiv(a, b):
    return -(-a // b)


def _round_up(a, b):
    return _cdiv(a, b) * b


@functools.lru_cache(maxsize=None)
def _vmem_limit_bytes():
    """Scoped-VMEM cap: ~3/4 of physical (96 MiB on 128 MiB parts, 48 MiB on v7x)."""
    cap = 64 * 1024 * 1024
    try:
        cap = int(pltpu.get_tpu_info().vmem_capacity_bytes)
    except Exception:
        pass
    return min((cap * 3) // 4, 96 * 1024 * 1024)


def _sublane_pack(dtype):
    # sublane packing: 8 for 4-byte, 16 for 2-byte, 32 for 1-byte dtypes
    return 32 // jnp.dtype(dtype).itemsize


def _pick_tile_rows(n_rows, row_bytes, sublane):
    """Rows per block: VMEM-budgeted (padded footprint), multiple of the dtype
    sublane packing, keeping >= 8 grid steps on big inputs (pipelining + v7x
    megacore)."""
    tr = _VMEM_BUDGET_BYTES // (4 * max(1, row_bytes))
    tr = max(sublane, min(4096, tr))
    tr = min(tr, _round_up(n_rows, sublane))
    while tr > 256 and _cdiv(n_rows, tr) < 8:
        tr //= 2
    return max(sublane, (tr // sublane) * sublane)


def _pick_hw_tile(hw, n_batch, col_bytes):
    """Lane tile for channels_first: multiple of 128, VMEM-budgeted, and small
    enough that the whole (N, HW) grid has >= ~8 steps for pipelining and v7x
    megacore sharding."""
    if hw <= 128:
        return hw
    t_budget = _VMEM_BUDGET_BYTES // (4 * max(1, col_bytes))
    t_budget = max(128, (t_budget // 128) * 128)
    min_hw_steps = _cdiv(8, max(1, n_batch))
    t_steps = max(128, _round_up(_cdiv(hw, min_hw_steps), 128))
    t = min(t_budget, t_steps)
    return hw if t >= hw else t


# ----------------------------------------------------------------------------
# Kernels
# ----------------------------------------------------------------------------

def _ln_rows_kernel(x_ref, w_ref, b_ref, o_ref, *, eps):
    # x_ref: (TR, C); w_ref/b_ref: (1, C).  Normalize each row over C.
    x = x_ref[...].astype(jnp.float32)
    mean = jnp.mean(x, axis=-1, keepdims=True)
    xc = x - mean
    var = jnp.mean(xc * xc, axis=-1, keepdims=True)     # biased var (matches torch)
    inv = lax.rsqrt(var + eps)
    w = w_ref[...].astype(jnp.float32)
    b = b_ref[...].astype(jnp.float32)
    o_ref[...] = (xc * inv * w + b).astype(o_ref.dtype)


def _ln_rows_packed_kernel(x_ref, seg_ref, w_ref, b_ref, o_ref, *, eps, inv_c):
    # x_ref: (TR, k*C) — k original rows packed per block row (lane-dense).
    # seg_ref: (k*C, k*C) block-diagonal 0/1 matrix; x @ seg broadcasts each
    # segment's sum back to its own lanes, so the C-wise reduction runs on the
    # MXU and every vld/vst stays lane-dense.
    #
    # Both segmented sums are independent MXU pushes (no serial mean -> xc
    # chain on v5e's critical path); var = E[x^2] - mean^2, clamped at 0.
    x = x_ref[...].astype(jnp.float32)
    seg = seg_ref[...]
    s1 = jnp.dot(x, seg, precision=lax.Precision.HIGHEST,
                 preferred_element_type=jnp.float32)
    s2 = jnp.dot(x * x, seg, precision=lax.Precision.HIGHEST,
                 preferred_element_type=jnp.float32)
    mean = s1 * inv_c
    var = jnp.maximum(s2 * inv_c - mean * mean, 0.0)
    inv = lax.rsqrt(var + eps)
    o_ref[...] = ((x - mean) * inv * w_ref[...] + b_ref[...]).astype(o_ref.dtype)


def _ln_cfirst_kernel(x_ref, w_ref, b_ref, o_ref, *, eps):
    # x_ref: (1, C, T) — normalize over the channel (sublane) axis per column;
    # the lane dim is spatial => dense stores, and no NCHW<->NHWC transposes.
    x = x_ref[...].astype(jnp.float32)
    mean = jnp.mean(x, axis=1, keepdims=True)
    xc = x - mean
    var = jnp.mean(xc * xc, axis=1, keepdims=True)
    inv = lax.rsqrt(var + eps)
    w = w_ref[...].astype(jnp.float32)                   # (1, C, 1)
    b = b_ref[...].astype(jnp.float32)
    o_ref[...] = (xc * inv * w + b).astype(o_ref.dtype)


# ----------------------------------------------------------------------------
# Wrappers (pallas_call plumbing)
# ----------------------------------------------------------------------------

def _ln_rows_plain(x2d, weight, bias, eps):
    R, C = x2d.shape
    itemsize = jnp.dtype(x2d.dtype).itemsize
    pack = _sublane_pack(x2d.dtype)
    row_bytes = _round_up(C, 128) * itemsize             # padded lane footprint
    tr = _pick_tile_rows(R, row_bytes, pack)
    grid = (_cdiv(R, tr),)                               # ragged tail handled by Pallas
    w2d = weight.astype(jnp.float32).reshape(1, C)
    b2d = bias.astype(jnp.float32).reshape(1, C)
    cost = pl.CostEstimate(flops=8 * R * C, transcendentals=R,
                           bytes_accessed=2 * R * C * itemsize)
    return pl.pallas_call(
        functools.partial(_ln_rows_kernel, eps=eps),
        out_shape=jax.ShapeDtypeStruct((R, C), x2d.dtype),
        grid_spec=pltpu.PrefetchScalarGridSpec(
            num_scalar_prefetch=0,
            grid=grid,
            in_specs=[
                pl.BlockSpec((tr, C), lambda i: (i, 0)),
                pl.BlockSpec((1, C), lambda i: (0, 0)),
                pl.BlockSpec((1, C), lambda i: (0, 0)),
            ],
            out_specs=pl.BlockSpec((tr, C), lambda i: (i, 0)),
        ),
        compiler_params=pltpu.CompilerParams(
            dimension_semantics=("parallel",),
            vmem_limit_bytes=_vmem_limit_bytes()),
        cost_estimate=cost,
    )(x2d, w2d, b2d)


def _ln_rows_packed(x2d, weight, bias, eps, k):
    R, C = x2d.shape
    kc = k * C
    Rp = R // k
    itemsize = jnp.dtype(x2d.dtype).itemsize
    pack = _sublane_pack(x2d.dtype)
    xp = x2d.reshape(Rp, kc)                             # free (row-major contiguous)
    seg_ids = jnp.arange(kc, dtype=jnp.int32) // C
    seg = (seg_ids[:, None] == seg_ids[None, :]).astype(jnp.float32)
    w_t = jnp.tile(weight.astype(jnp.float32).reshape(C), k).reshape(1, kc)
    b_t = jnp.tile(bias.astype(jnp.float32).reshape(C), k).reshape(1, kc)
    row_bytes = _round_up(kc, 128) * itemsize            # padded lane footprint
    tr = _pick_tile_rows(Rp, row_bytes, pack)
    grid = (_cdiv(Rp, tr),)
    cost = pl.CostEstimate(
        flops=4 * Rp * kc * kc + 8 * R * C,
        transcendentals=R,
        bytes_accessed=2 * R * C * itemsize + kc * kc * 4)
    out = pl.pallas_call(
        functools.partial(_ln_rows_packed_kernel, eps=eps, inv_c=1.0 / C),
        out_shape=jax.ShapeDtypeStruct((Rp, kc), x2d.dtype),
        grid_spec=pltpu.PrefetchScalarGridSpec(
            num_scalar_prefetch=0,
            grid=grid,
            in_specs=[
                pl.BlockSpec((tr, kc), lambda i: (i, 0)),
                pl.BlockSpec((kc, kc), lambda i: (0, 0)),
                pl.BlockSpec((1, kc), lambda i: (0, 0)),
                pl.BlockSpec((1, kc), lambda i: (0, 0)),
            ],
            out_specs=pl.BlockSpec((tr, kc), lambda i: (i, 0)),
        ),
        compiler_params=pltpu.CompilerParams(
            dimension_semantics=("parallel",),
            vmem_limit_bytes=_vmem_limit_bytes()),
        cost_estimate=cost,
    )(xp, seg, w_t, b_t)
    return out.reshape(R, C)


@functools.partial(jax.jit, static_argnames=("eps",))
def _ln_channels_last(x, weight, bias, eps):
    orig_shape = x.shape
    C = orig_shape[-1]
    x2d = x.reshape(-1, C)
    R = x2d.shape[0]
    k_max = max(1, 128 // C)

    if k_max >= 2 and R >= 2:
        # Largest pack factor <= 128//C that divides R (single lane-dense call).
        k_div = 1
        for k in range(min(k_max, R), 1, -1):
            if R % k == 0:
                k_div = k
                break
        if k_div >= 2 and k_div * C >= 64:
            out2d = _ln_rows_packed(x2d, weight, bias, eps, k_div)
        else:
            R_main = (R // k_max) * k_max
            if R_main >= k_max:
                # Packed lane-dense main body + tiny plain tail (< k_max rows):
                # keeps masked lane-width-C stores off the bulk of the data.
                out_main = _ln_rows_packed(x2d[:R_main], weight, bias, eps, k_max)
                out_tail = _ln_rows_plain(x2d[R_main:], weight, bias, eps)
                out2d = jnp.concatenate([out_main, out_tail], axis=0)
            else:
                out2d = _ln_rows_plain(x2d, weight, bias, eps)
    else:
        # C already spans >= a full lane group (or degenerate R): plain kernel.
        # TODO(synk): very large C (> ~64K f32) would need a C-tiled two-pass
        # variant; not needed for this architecture's channel counts.
        out2d = _ln_rows_plain(x2d, weight, bias, eps)
    return out2d.reshape(orig_shape)


@functools.partial(jax.jit, static_argnames=("eps",))
def _ln_channels_first(x, weight, bias, eps):
    N, C, H, W = x.shape
    HW = H * W
    itemsize = jnp.dtype(x.dtype).itemsize
    pack = _sublane_pack(x.dtype)
    x3 = x.reshape(N, C, HW)                             # free (contiguous)
    w3 = weight.astype(jnp.float32).reshape(1, C, 1)
    b3 = bias.astype(jnp.float32).reshape(1, C, 1)
    col_bytes = _round_up(C, pack) * itemsize            # padded sublane footprint
    t = _pick_hw_tile(HW, N, col_bytes)
    grid = (N, _cdiv(HW, t))
    cost = pl.CostEstimate(flops=8 * N * C * HW, transcendentals=N * HW,
                           bytes_accessed=2 * N * C * HW * itemsize)
    out = pl.pallas_call(
        functools.partial(_ln_cfirst_kernel, eps=eps),
        out_shape=jax.ShapeDtypeStruct((N, C, HW), x.dtype),
        grid_spec=pltpu.PrefetchScalarGridSpec(
            num_scalar_prefetch=0,
            grid=grid,
            in_specs=[
                pl.BlockSpec((1, C, t), lambda n, j: (n, 0, j)),
                pl.BlockSpec((1, C, 1), lambda n, j: (0, 0, 0)),
                pl.BlockSpec((1, C, 1), lambda n, j: (0, 0, 0)),
            ],
            out_specs=pl.BlockSpec((1, C, t), lambda n, j: (n, 0, j)),
        ),
        compiler_params=pltpu.CompilerParams(
            dimension_semantics=("parallel", "parallel"),
            vmem_limit_bytes=_vmem_limit_bytes()),
        cost_estimate=cost,
    )(x3, w3, b3)
    return out.reshape(N, C, H, W)


# ----------------------------------------------------------------------------
# Module
# ----------------------------------------------------------------------------

class LayerNormPallas:
    """JAX/Pallas port of the PyTorch LayerNorm module from man_arch.py."""

    def __init__(self, normalized_shape, eps=1e-6, data_format="channels_last"):
        if data_format not in ("channels_last", "channels_first"):
            raise NotImplementedError
        # deterministic init matching nn.Parameter(torch.ones/zeros)
        self.weight = jnp.ones((normalized_shape,), dtype=jnp.float32)
        self.bias = jnp.zeros((normalized_shape,), dtype=jnp.float32)
        self.eps = eps
        self.data_format = data_format
        self.normalized_shape = normalized_shape

    def __call__(self, x):
        C = self.normalized_shape
        if self.data_format == "channels_last":
            assert x.shape[-1] == C
            return _ln_channels_last(x, self.weight, self.bias, eps=self.eps)
        # channels_first (NCHW). NOTE: the original PyTorch forward has a bare
        # `return` here (returns None, an upstream bug); we return the clearly
        # intended normalized result.
        assert x.shape[1] == C
        return _ln_channels_first(x, self.weight, self.bias, eps=self.eps)


# ----------------------------------------------------------------------------
# References + self-test
# ----------------------------------------------------------------------------

def _ref_channels_first(x, w, b, eps):
    u = jnp.mean(x, axis=1, keepdims=True)
    s = jnp.mean((x - u) ** 2, axis=1, keepdims=True)
    xn = (x - u) / jnp.sqrt(s + eps)
    return w[None, :, None, None] * xn + b[None, :, None, None]


def _ref_channels_last(x, w, b, eps):
    u = jnp.mean(x, axis=-1, keepdims=True)
    s = jnp.mean((x - u) ** 2, axis=-1, keepdims=True)
    xn = (x - u) / jnp.sqrt(s + eps)
    return xn * w + b


if __name__ == "__main__":
    key = jax.random.PRNGKey(0)
    k1, k2, k3, k4, k5, k6 = jax.random.split(key, 6)

    N, C, H, W = 2, 4, 16, 16

    # --- channels_first (NCHW), native kernel (no transposes) ---
    x_cf = jax.random.normal(k1, (N, C, H, W), dtype=jnp.float32)
    ln_cf = LayerNormPallas(C, eps=1e-6, data_format="channels_first")
    ln_cf.weight = jnp.linspace(0.5, 1.5, C, dtype=jnp.float32)
    ln_cf.bias = jnp.linspace(-0.2, 0.2, C, dtype=jnp.float32)
    out_cf = jax.block_until_ready(ln_cf(x_cf))
    ref_cf = _ref_channels_first(x_cf, ln_cf.weight, ln_cf.bias, 1e-6)
    assert out_cf.shape == (N, C, H, W)
    assert jnp.max(jnp.abs(out_cf - ref_cf)) < 1e-4

    # --- channels_last (NHWC), fully packed kernel (C=4 -> 32 rows per block row) ---
    x_cl = jax.random.normal(k2, (N, H, W, C), dtype=jnp.float32)
    ln_cl = LayerNormPallas(C, eps=1e-6, data_format="channels_last")
    ln_cl.weight = jnp.linspace(1.5, 0.5, C, dtype=jnp.float32)
    ln_cl.bias = jnp.linspace(0.3, -0.3, C, dtype=jnp.float32)
    out_cl = jax.block_until_ready(ln_cl(x_cl))
    ref_cl = _ref_channels_last(x_cl, ln_cl.weight, ln_cl.bias, 1e-6)
    assert out_cl.shape == (N, H, W, C)
    assert jnp.max(jnp.abs(out_cl - ref_cl)) < 1e-4

    # --- channels_last, odd shape: divisor-packed path (R=105 -> k=21, 84 lanes) ---
    x_odd = jax.random.normal(k3, (3, 5, 7, C), dtype=jnp.float32)
    out_odd = jax.block_until_ready(ln_cl(x_odd))
    ref_odd = _ref_channels_last(x_odd, ln_cl.weight, ln_cl.bias, 1e-6)
    assert jnp.max(jnp.abs(out_odd - ref_odd)) < 1e-4

    # --- channels_last, prime row count: packed main + tiny plain tail + concat ---
    x_prime = jax.random.normal(k4, (1, 1, 101, C), dtype=jnp.float32)
    out_prime = jax.block_until_ready(ln_cl(x_prime))
    ref_prime = _ref_channels_last(x_prime, ln_cl.weight, ln_cl.bias, 1e-6)
    assert jnp.max(jnp.abs(out_prime - ref_prime)) < 1e-4

    # --- channels_last, C=128: plain per-row kernel (already lane-dense) ---
    C2 = 128
    x_big = jax.random.normal(k5, (2, 4, 4, C2), dtype=jnp.float32)
    ln_big = LayerNormPallas(C2, eps=1e-6, data_format="channels_last")
    ln_big.weight = jnp.linspace(0.8, 1.2, C2, dtype=jnp.float32)
    ln_big.bias = jnp.linspace(-0.1, 0.1, C2, dtype=jnp.float32)
    out_big = jax.block_until_ready(ln_big(x_big))
    ref_big = _ref_channels_last(x_big, ln_big.weight, ln_big.bias, 1e-6)
    assert jnp.max(jnp.abs(out_big - ref_big)) < 1e-4

    # --- channels_first, small odd spatial extent (full-dim lane block) ---
    x_cf_odd = jax.random.normal(k6, (2, C, 5, 7), dtype=jnp.float32)
    out_cf_odd = jax.block_until_ready(ln_cf(x_cf_odd))
    ref_cf_odd = _ref_channels_first(x_cf_odd, ln_cf.weight, ln_cf.bias, 1e-6)
    assert jnp.max(jnp.abs(out_cf_odd - ref_cf_odd)) < 1e-4

    print("KERNEL_OK")
</pallas_src>

<mosaic_0001>
module attributes {stable_mosaic.version = 11 : i64} {
  func.func @_ln_cfirst_kernel(%arg0: i32, %arg1: i32, %arg2: memref<1x4x128xf32, #tpu.memory_space<vmem>>, %arg3: memref<1x4x1xf32, #tpu.memory_space<vmem>>, %arg4: memref<1x4x1xf32, #tpu.memory_space<vmem>>, %arg5: memref<1x4x128xf32, #tpu.memory_space<vmem>>) attributes {dimension_semantics = [#tpu.dimension_semantics<parallel>, #tpu.dimension_semantics<parallel>], iteration_bounds = array<i64: 2, 2>, scalar_prefetch = 0 : i64, scratch_operands = 0 : i64, tpu.core_type = #tpu.core_type<tc>, window_params = [{transform_indices = @transform_0, window_bounds = array<i64: 1, 4, 128>}, {pipeline_mode = #tpu.pipeline_mode<synchronous>, transform_indices = @transform_1, window_bounds = array<i64: 1, 4, 1>}, {pipeline_mode = #tpu.pipeline_mode<synchronous>, transform_indices = @transform_2, window_bounds = array<i64: 1, 4, 1>}, {transform_indices = @transform_3, window_bounds = array<i64: 1, 4, 128>}]} {
    %c0 = arith.constant 0 : index
    %c0_0 = arith.constant 0 : index
    %c0_1 = arith.constant 0 : index
    %0 = vector.load %arg2[%c0, %c0_0, %c0_1] : memref<1x4x128xf32, #tpu.memory_space<vmem>>, vector<1x4x128xf32>
    %cst = arith.constant dense<0.000000e+00> : vector<1x128xf32>
    %1 = vector.multi_reduction <add>, %0, %cst [1] : vector<1x4x128xf32> to vector<1x128xf32>
    %2 = vector.shape_cast %1 : vector<1x128xf32> to vector<1x1x128xf32>
    %cst_2 = arith.constant 4.000000e+00 : f32
    %3 = vector.broadcast %cst_2 : f32 to vector<1x1x128xf32>
    %4 = arith.divf %2, %3 : vector<1x1x128xf32>
    %5 = vector.broadcast %4 : vector<1x1x128xf32> to vector<1x4x128xf32>
    %6 = arith.subf %0, %5 : vector<1x4x128xf32>
    %7 = arith.mulf %6, %6 : vector<1x4x128xf32>
    %cst_3 = arith.constant dense<0.000000e+00> : vector<1x128xf32>
    %8 = vector.multi_reduction <add>, %7, %cst_3 [1] : vector<1x4x128xf32> to vector<1x128xf32>
    %9 = vector.shape_cast %8 : vector<1x128xf32> to vector<1x1x128xf32>
    %cst_4 = arith.constant 4.000000e+00 : f32
    %10 = vector.broadcast %cst_4 : f32 to vector<1x1x128xf32>
    %11 = arith.divf %9, %10 : vector<1x1x128xf32>
    %cst_5 = arith.constant 9.99999997E-7 : f32
    %12 = vector.broadcast %cst_5 : f32 to vector<1x1x128xf32>
    %13 = arith.addf %11, %12 : vector<1x1x128xf32>
    %14 = math.rsqrt %13 : vector<1x1x128xf32>
    %c0_6 = arith.constant 0 : index
    %c0_7 = arith.constant 0 : index
    %c0_8 = arith.constant 0 : index
    %15 = vector.load %arg3[%c0_6, %c0_7, %c0_8] : memref<1x4x1xf32, #tpu.memory_space<vmem>>, vector<1x4x1xf32>
    %c0_9 = arith.constant 0 : index
    %c0_10 = arith.constant 0 : index
    %c0_11 = arith.constant 0 : index
    %16 = vector.load %arg4[%c0_9, %c0_10, %c0_11] : memref<1x4x1xf32, #tpu.memory_space<vmem>>, vector<1x4x1xf32>
    %17 = vector.broadcast %14 : vector<1x1x128xf32> to vector<1x4x128xf32>
    %18 = arith.mulf %6, %17 : vector<1x4x128xf32>
    %19 = vector.broadcast %15 : vector<1x4x1xf32> to vector<1x4x128xf32>
    %20 = arith.mulf %18, %19 : vector<1x4x128xf32>
    %21 = vector.broadcast %16 : vector<1x4x1xf32> to vector<1x4x128xf32>
    %22 = arith.addf %20, %21 : vector<1x4x128xf32>
    %c0_12 = arith.constant 0 : index
    %c0_13 = arith.constant 0 : index
    %c0_14 = arith.constant 0 : index
    %23 = vector.load %arg5[%c0_12, %c0_13, %c0_14] : memref<1x4x128xf32, #tpu.memory_space<vmem>>, vector<1x4x128xf32>
    tpu.vector_store %arg5[%c0_12, %c0_13, %c0_14], %22 {strides = array<i32>} : memref<1x4x128xf32, #tpu.memory_space<vmem>>, vector<1x4x128xf32>,
    return
  }
  func.func @transform_0(%arg0: i32, %arg1: i32) -> (i32, i32, i32) {
    %c0_i32 = arith.constant 0 : i32
    %c0_i32_0 = arith.constant 0 : i32
    return %arg0, %c0_i32, %arg1 : i32, i32, i32
  }
  func.func @transform_1(%arg0: i32, %arg1: i32) -> (i32, i32, i32) {
    %c0_i32 = arith.constant 0 : i32
    %c0_i32_0 = arith.constant 0 : i32
    %c0_i32_1 = arith.constant 0 : i32
    %c0_i32_2 = arith.constant 0 : i32
    return %c0_i32, %c0_i32_0, %c0_i32_1 : i32, i32, i32
  }
  func.func @transform_2(%arg0: i32, %arg1: i32) -> (i32, i32, i32) {
    %c0_i32 = arith.constant 0 : i32
    %c0_i32_0 = arith.constant 0 : i32
    %c0_i32_1 = arith.constant 0 : i32
    %c0_i32_2 = arith.constant 0 : i32
    return %c0_i32, %c0_i32_0, %c0_i32_1 : i32, i32, i32
  }
  func.func @transform_3(%arg0: i32, %arg1: i32) -> (i32, i32, i32) {
    %c0_i32 = arith.constant 0 : i32
    %c0_i32_0 = arith.constant 0 : i32
    return %arg0, %c0_i32, %arg1 : i32, i32, i32
  }
}

</mosaic_0001>

<llo_original>
// kernel: _ln_channels_first.1
$region0: #{_ln_channels_first.1}
  #allocation0 [shape = 'u32[]', space=smem, size = 0x4, offset = 0x4, fixed_abs, tag = 'smem constant byte address 0x4 - core index']
  #allocation1 [shape = 'u32[144,128]{1,0:T(1,128)}', space=vmem, size = 0x12000, scoped, tag = 'internal scratch']
  %s0 = inlined_call_operand.vmem [shape: f32[2,4,256], index: 0, kind: input, shape index: {}]
  %s1 = inlined_call_operand.vmem [shape: f32[1,4,1], index: 1, kind: input, shape index: {}]
  %s2 = inlined_call_operand.vmem [shape: f32[1,4,1], index: 2, kind: input, shape index: {}]
  %s3 = inlined_call_operand.vmem [shape: f32[2,4,256], index: 3, kind: output, shape index: {}]
  %s4 = sld [smem:[#allocation0]]
  $region45: #{_ln_channels_first.1} parent=0
    _
  %s6 = ssub.s32 1, %s4
  %s7 = scalar_select 0, %s6, %s4
  loop: start=0, step=1, limit=6
  $region2: #{_ln_channels_first.1} parent=0 // loop_pre_header
    _
  $region3: #{_ln_channels_first.1} parent=0 // loop_header
    %s9 = sphi 0, %s13
    %p10 = scmp.ge.s32.totalorder %s9, 6
    %s16 = sphi 0, %s28
    %s17 = sphi 0, %s24
    %s18 = sphi 0, %s16
    %s19 = sphi 0, %s17
    %s20 = sphi 0, %s18
    %s21 = sphi 0, %s19
    %s33 = sphi 0, %s35
    %s36 = sphi 0, %s33
    %s37 = sphi 0, %s36
    %s53 = sphi 0, %s37
    %s57 = sphi 0, %s57
    %s59 = sphi 0, %s57
    %s60 = sphi 0, %s59
    %s74 = sphi 0, %s60
    %s78 = sphi 0, %s78
    %s80 = sphi 0, %s78
    %s81 = sphi 0, %s80
    %s95 = sphi 0, %s81
    %s103 = sphi 0, %s105
    %s106 = sphi 0, %s103
    %s107 = sphi 0, %s106
    %s123 = sphi 0, %s107
  $region4: #{_ln_channels_first.1} parent=0 // loop_header_branch
    %12 = sbr.rel (%p10) target = $region8
  $region5: #{_ln_channels_first.1} parent=0 // loop_body
    %s14 = ssub.s32 %s9, 1
    %s15 = ssub.s32 %s9, 2
    %s22 = sadd.s32 1, %s17
    %p23 = scmp.ge.s32.totalorder %s22, 2
    %s24 = scalar_select %p23, 0, %s22
    %s25 = sadd.s32 1, %s16
    %s26 = scalar_select %p23, %s25, %s16
    %p27 = scmp.ge.s32.totalorder %s26, 2
    %s28 = scalar_select %p27, 0, %s26
    %s29 = ssub.s32 %s16, %s28
    %s30 = ssub.s32 %s17, %s24
    %s31 = sor.u32 %s29, %s30
    %p32 = scmp.eq.s32.totalorder %s31, 0
    %s34 = sadd.s32 %s33, 1
    %s35 = scalar_select %p32, %s33, %s34
    %p38 = pneg %p32
    %p39 = scmp.eq.s32.totalorder %s9, 3
    %p40 = por %p38, %p39
    %p41 = scmp.ne.s32.totalorder %s33, %s36
    %p42 = scmp.eq.s32.totalorder %s9, 0
    %p43 = por %p41, %p42
    %p44 = scmp.ne.s32.totalorder %s33, %s36
    %p45 = scmp.eq.s32.totalorder %s14, 3
    %p46 = por %p44, %p45
    %p47 = scmp.ne.s32.totalorder %s36, %s37
    %p48 = scmp.eq.s32.totalorder %s14, 0
    %p49 = por %p47, %p48
    %p50 = scmp.ne.s32.totalorder %s36, %s37
    %p51 = scmp.eq.s32.totalorder %s15, 3
    %p52 = por %p50, %p51
    %p54 = scmp.ne.s32.totalorder %s37, %s53
    %p55 = scmp.eq.s32.totalorder %s15, 0
    %p56 = por %p54, %p55
    %s58 = sadd.s32 %s57, 1
    %p61 = scmp.eq.s32.totalorder %s9, 3
    %p62 = scmp.ne.s32.totalorder %s57, %s59
    %p63 = scmp.eq.s32.totalorder %s9, 0
    %p64 = por %p62, %p63
    %p65 = scmp.ne.s32.totalorder %s57, %s59
    %p66 = scmp.eq.s32.totalorder %s14, 3
    %p67 = por %p65, %p66
    %p68 = scmp.ne.s32.totalorder %s59, %s60
    %p69 = scmp.eq.s32.totalorder %s14, 0
    %p70 = por %p68, %p69
    %p71 = scmp.ne.s32.totalorder %s59, %s60
    %p72 = scmp.eq.s32.totalorder %s15, 3
    %p73 = por %p71, %p72
    %p75 = scmp.ne.s32.totalorder %s60, %s74
    %p76 = scmp.eq.s32.totalorder %s15, 0
    %p77 = por %p75, %p76
    %s79 = sadd.s32 %s78, 1
    %p82 = scmp.eq.s32.totalorder %s9, 3
    %p83 = scmp.ne.s32.totalorder %s78, %s80
    %p84 = scmp.eq.s32.totalorder %s9, 0
    %p85 = por %p83, %p84
    %p86 = scmp.ne.s32.totalorder %s78, %s80
    %p87 = scmp.eq.s32.totalorder %s14, 3
    %p88 = por %p86, %p87
    %p89 = scmp.ne.s32.totalorder %s80, %s81
    %p90 = scmp.eq.s32.totalorder %s14, 0
    %p91 = por %p89, %p90
    %p92 = scmp.ne.s32.totalorder %s80, %s81
    %p93 = scmp.eq.s32.totalorder %s15, 3
    %p94 = por %p92, %p93
    %p96 = scmp.ne.s32.totalorder %s81, %s95
    %p97 = scmp.eq.s32.totalorder %s15, 0
    %p98 = por %p96, %p97
    %s99 = ssub.s32 %s16, %s28
    %s100 = ssub.s32 %s17, %s24
    %s101 = sor.u32 %s99, %s100
    %p102 = scmp.eq.s32.totalorder %s101, 0
    %s104 = sadd.s32 %s103, 1
    %s105 = scalar_select %p102, %s103, %s104
    %p108 = pneg %p102
    %p109 = scmp.eq.s32.totalorder %s9, 3
    %p110 = por %p108, %p109
    %p111 = scmp.ne.s32.totalorder %s103, %s106
    %p112 = scmp.eq.s32.totalorder %s9, 0
    %p113 = por %p111, %p112
    %p114 = scmp.ne.s32.totalorder %s103, %s106
    %p115 = scmp.eq.s32.totalorder %s14, 3
    %p116 = por %p114, %p115
    %p117 = scmp.ne.s32.totalorder %s106, %s107
    %p118 = scmp.eq.s32.totalorder %s14, 0
    %p119 = por %p117, %p118
    %p120 = scmp.ne.s32.totalorder %s106, %s107
    %p121 = scmp.eq.s32.totalorder %s15, 3
    %p122 = por %p120, %p121
    %p124 = scmp.ne.s32.totalorder %s107, %s123
    %p125 = scmp.eq.s32.totalorder %s15, 0
    %p126 = por %p124, %p125
    %p127 = scmp.le.s32.totalorder 1, %s9
    %p128 = scmp.lt.s32.totalorder %s9, 5
    %p129 = pnand %p127, %p128
    %p130 = pneg %p129
    // Predicated region
    $region9: #{_ln_channels_first.1} parent=5 // pred_check
      _
    $region10: #{_ln_channels_first.1} parent=5 // pred_check_branch
      %132 = sbr.rel (%p129) target = $region12
    $region11: #{_ln_channels_first.1} parent=5 // pred_region
      %s133 = ssub.s32 %s9, 1
      // Predicated region
      $region13: #{_ln_channels_first.1} parent=11 // pred_check
        %p134 = pneg %p70
      $region14: #{_ln_channels_first.1} parent=11 // pred_check_branch
        %136 = sbr.rel (%p134) target = $region16
      $region15: #{_ln_channels_first.1} parent=11 // pred_region
        _
      $region16: #{_ln_channels_first.1} parent=11 // pred_fallthru
        _
      // Predicated region
      $region17: #{_ln_channels_first.1} parent=11 // pred_check
        %p137 = pneg %p91
      $region18: #{_ln_channels_first.1} parent=11 // pred_check_branch
        %139 = sbr.rel (%p137) target = $region20
      $region19: #{_ln_channels_first.1} parent=11 // pred_region
        _
      $region20: #{_ln_channels_first.1} parent=11 // pred_fallthru
        _
    $region12: #{_ln_channels_first.1} parent=5 // pred_fallthru
      _
    %p140 = scmp.lt.s32.totalorder %s9, 4
    // Predicated region
    $region21: #{_ln_channels_first.1} parent=5 // pred_check
      %p141 = pneg %p140
    $region22: #{_ln_channels_first.1} parent=5 // pred_check_branch
      %143 = sbr.rel (%p141) target = $region24
    $region23: #{_ln_channels_first.1} parent=5 // pred_region
      // Predicated region
      $region25: #{_ln_channels_first.1} parent=23 // pred_check
        %p144 = pneg %p43
      $region26: #{_ln_channels_first.1} parent=23 // pred_check_branch
        %146 = sbr.rel (%p144) target = $region28
      $region27: #{_ln_channels_first.1} parent=23 // pred_region
        %p147 = scmp.lt.s32.totalorder %s16, 1
        %s148 = scalar_select %p147, %s16, 1
        %p149 = scmp.lt.s32.totalorder %s17, 1
        %s150 = scalar_select %p149, %s17, 1
        %s151 = smul.addr %s148, 2
        %s152 = sadd.s32 %s150, %s151
        %s153 = smul.addr %s152, 4
        %s154 = scalar_lea.vmem %s0, %s153
      $region28: #{_ln_channels_first.1} parent=23 // pred_fallthru
        _
    $region24: #{_ln_channels_first.1} parent=5 // pred_fallthru
      _
    %p155 = scmp.le.s32.totalorder 1, %s9
    %p156 = scmp.lt.s32.totalorder %s9, 5
    %p157 = pnand %p155, %p156
    %p158 = pneg %p157
    // Predicated region
    $region29: #{_ln_channels_first.1} parent=5 // pred_check
      _
    $region30: #{_ln_channels_first.1} parent=5 // pred_check_branch
      %160 = sbr.rel (%p157) target = $region32
    $region31: #{_ln_channels_first.1} parent=5 // pred_region
      %s161 = ssub.s32 %s9, 1
      %p162 = scmp.lt.s32.totalorder %s18, 1
      %s163 = scalar_select %p162, %s18, 1
      %p164 = scmp.lt.s32.totalorder %s19, 1
      %s165 = scalar_select %p164, %s19, 1
      %s166 = smul.addr %s163, 2
      %s167 = sadd.s32 %s165, %s166
      %s168 = smul.addr %s167, 4
      %s169 = scalar_lea.vmem %s0, %s168
      %p170 = pneg %p49
      %p171 = pneg %p46
      %p172 = pneg %p70
      %p173 = pneg %p67
      %p174 = pneg %p91
      %p175 = pneg %p88
      %p176 = pneg %p119
      %p177 = pneg %p116
      %p178 = scmp.lt.s32.totalorder %s18, 1
      %s179 = scalar_select %p178, %s18, 1
      %p180 = scmp.lt.s32.totalorder %s19, 1
      %s181 = scalar_select %p180, %s19, 1
      %s182 = smul.addr %s179, 2
      %s183 = sadd.s32 %s181, %s182
      %s184 = smul.addr %s183, 4
      %s185 = scalar_lea.vmem %s3, %s184
      %p186 = scmp.lt.s32.totalorder %s18, 1
      %s187 = scalar_select %p186, %s18, 1
      %p188 = scmp.lt.s32.totalorder %s19, 1
      %s189 = scalar_select %p188, %s19, 1
      %s190 = smul.addr %s187, 2
      %s191 = sadd.s32 %s189, %s190
      %s192 = smul.addr %s191, 4
      %s193 = scalar_lea.vmem %s0, %s192
      %p194 = scmp.lt.s32.totalorder %s18, 1
      %s195 = scalar_select %p194, %s18, 1
      %p196 = scmp.lt.s32.totalorder %s19, 1
      %s197 = scalar_select %p196, %s19, 1
      %s198 = smul.addr %s195, 2
      %s199 = sadd.s32 %s197, %s198
      %s200 = smul.addr %s199, 4
      %s201 = scalar_lea.vmem %s3, %s200
      %v202 = vld [vmem:[%s193] sm:$0xf]
      %vm203 = vcmask 1043456
      %v204 = vsel %vm203, %v202, 0.0
      %v205 = vrot.slane %v204, 4
      %v206 = vadd.f32 %v204, %v205
      %v207 = vrot.slane %v206, 2
      %v208 = vadd.f32 %v206, %v207
      %v209 = vrot.slane %v208, 1
      %v210 = vadd.f32 %v208, %v209
      %v211 = vrcp.pop 4.0
      %v212 = vmul.f32 %v210, %v211
      %v213 = vsub.f32 %v202, %v212
      %v214 = vmul.f32 %v213, %v213
      %v215 = vsel %vm203, %v214, 0.0
      %v216 = vrot.slane %v215, 4
      %v217 = vadd.f32 %v215, %v216
      %v218 = vrot.slane %v217, 2
      %v219 = vadd.f32 %v217, %v218
      %v220 = vrot.slane %v219, 1
      %v221 = vadd.f32 %v219, %v220
      %v222 = vmul.f32 %v221, %v211
      %v223 = vadd.f32 %v222, 1e-06
      %v224 = vrsqrt.pop %v223
      %v225 = vld [vmem:[%s1] sm:$0xf]
      %v226 = vld [vmem:[%s2] sm:$0xf]
      %v227 = vmul.f32 %v213, %v224
      %229 = vset.pattern.permute.xlu0 0
      %230 = vperm.xlu0 %229, %v225
      %v231 = vpop.permute.xlu0 %230
      %v233 = vmul.f32 %v227, %v231
      %235 = vset.pattern.permute.xlu0 0
      %236 = vperm.xlu0 %235, %v226
      %v237 = vpop.permute.xlu0 %236
      %v239 = vadd.f32 %v233, %v237
      %240 = vst [vmem:[%s201] sm:$0xf] %v239
      %p241 = scmp.lt.s32.totalorder %s18, 1
      %s242 = scalar_select %p241, %s18, 1
      %p243 = scmp.lt.s32.totalorder %s19, 1
      %s244 = scalar_select %p243, %s19, 1
      %s245 = smul.addr %s242, 2
      %s246 = sadd.s32 %s244, %s245
      %s247 = smul.addr %s246, 4
      %s248 = scalar_lea.vmem %s3, %s247
      // Predicated region
      $region33: #{_ln_channels_first.1} parent=31 // pred_check
        %p249 = pneg %p116
      $region34: #{_ln_channels_first.1} parent=31 // pred_check_branch
        %251 = sbr.rel (%p249) target = $region36
      $region35: #{_ln_channels_first.1} parent=31 // pred_region
        _
      $region36: #{_ln_channels_first.1} parent=31 // pred_fallthru
        _
    $region32: #{_ln_channels_first.1} parent=5 // pred_fallthru
      _
    %p252 = scmp.le.s32.totalorder 2, %s9
    // Predicated region
    $region37: #{_ln_channels_first.1} parent=5 // pred_check
      %p253 = pneg %p252
    $region38: #{_ln_channels_first.1} parent=5 // pred_check_branch
      %255 = sbr.rel (%p253) target = $region40
    $region39: #{_ln_channels_first.1} parent=5 // pred_region
      %s256 = ssub.s32 %s9, 2
      // Predicated region
      $region41: #{_ln_channels_first.1} parent=39 // pred_check
        %p257 = pneg %p122
      $region42: #{_ln_channels_first.1} parent=39 // pred_check_branch
        %259 = sbr.rel (%p257) target = $region44
      $region43: #{_ln_channels_first.1} parent=39 // pred_region
        %p260 = scmp.lt.s32.totalorder %s20, 1
        %s261 = scalar_select %p260, %s20, 1
        %p262 = scmp.lt.s32.totalorder %s21, 1
        %s263 = scalar_select %p262, %s21, 1
        %s264 = smul.addr %s261, 2
        %s265 = sadd.s32 %s263, %s264
        %s266 = smul.addr %s265, 4
        %s267 = scalar_lea.vmem %s3, %s266
      $region44: #{_ln_channels_first.1} parent=39 // pred_fallthru
        _
    $region40: #{_ln_channels_first.1} parent=5 // pred_fallthru
      _
  $region6: #{_ln_channels_first.1} parent=0 // loop_footer
    %s13 = sadd.s32 1, %s9
  $region7: #{_ln_channels_first.1} parent=0 // loop_footer_branch
    %8 = sbr.rel target = $region3
  $region8: #{_ln_channels_first.1} parent=0 // loop_exit
    _

</llo_original>
